<compile_context>
chip_gen: v7x
topology: tpu7x:2x2x1
jax: 0.10.0
libtpu: 0.0.40
codegen_flags: <defaults>
</compile_context>

<pallas_src>
import functools

import jax
import jax.numpy as jnp
from jax import lax
from jax.experimental import pallas as pl
from jax.experimental.pallas import tpu as pltpu


def _addcoords_kernel(x_ref, o_ref, *, H, W, St, nco, with_r):
    """One (batch-tile, spatial-tile) grid step.

    x_ref: (Bt, C,     St)  input channels, spatial dims flattened to lanes
    o_ref: (Bt, C_out, St)  C_out = C + nco, nco = 2 (+1 if with_r)
    """
    Bt = x_ref.shape[0]
    s = pl.program_id(1)

    # Flat spatial positions covered by this tile, recovered as (row, col).
    # div/mod is done in f32 with a +0.5 guard so floor() is exact for
    # H*W < 2**23 (avoids vector integer divide).
    base = (s * St).astype(jnp.float32)
    p = lax.broadcasted_iota(jnp.int32, (1, St), 1).astype(jnp.float32) + base
    h = jnp.floor((p + 0.5) / W)
    w = p - h * W

    yy = (h - H / 2.0) / ((H - 1) / 2.0) + 1.0 / (H - 1)
    # NOTE: 1/(H-1) below is intentional — reproduces the original module's quirk.
    xx = (w - W / 2.0) / ((W - 1) / 2.0) + 1.0 / (H - 1)

    coords = [yy, xx]
    if with_r:
        coords = [jnp.sqrt(yy * yy + xx * xx)] + coords
    cstack = jnp.concatenate(coords, axis=0)                  # (nco, St) f32
    cblock = jnp.broadcast_to(cstack[None], (Bt, nco, St))    # (Bt, nco, St)

    # Assemble the full output block and store it with a single unmasked write.
    xin = x_ref[...].astype(jnp.float32)
    full = jnp.concatenate([cblock, xin], axis=1)             # (Bt, C_out, St)
    o_ref[...] = full.astype(o_ref.dtype)


def add_coords(x, with_r=False, *, spatial_tile=2048):
    """Pallas AddCoords(rank=2).  x: (B, C, H, W) -> (B, C + 2(+1), H, W)."""
    B, C, H, W = x.shape
    nco = 3 if with_r else 2
    C_out = C + nco
    HW = H * W
    itemsize = jnp.dtype(x.dtype).itemsize

    # ---- tile selection (lane-dense + VMEM-aware) -----------------------
    target_block_bytes = 4 * 1024 * 1024          # in+out bytes per grid step
    if HW < 256:
        St = HW                                    # full spatial extent (always legal)
    else:
        St = (min(spatial_tile, HW) // 128) * 128  # lane-dense multiple of 128
        while St > 128 and (C + C_out) * St * itemsize > target_block_bytes:
            St = max(128, ((St // 2) // 128) * 128)
    # TODO(synk): extremely large C (C * 128 * itemsize >> 4 MiB) would need an
    # additional channel-tiling pass for v7x; not needed for CoordConv-sized C.

    per_batch = (C + C_out) * St * itemsize
    Bt = int(max(1, min(B, target_block_bytes // max(1, per_batch))))

    in_blk = Bt * C * St * itemsize
    out_blk = Bt * C_out * St * itemsize
    vmem_limit = int(min(64 * 1024 * 1024,
                         max(32 * 1024 * 1024, 4 * (in_blk + out_blk))))

    grid = (pl.cdiv(B, Bt), pl.cdiv(HW, St))

    kernel = functools.partial(_addcoords_kernel, H=H, W=W, St=St,
                               nco=nco, with_r=with_r)
    out_flat = pl.pallas_call(
        kernel,
        out_shape=jax.ShapeDtypeStruct((B, C_out, HW), x.dtype),
        grid_spec=pltpu.PrefetchScalarGridSpec(
            num_scalar_prefetch=0,
            grid=grid,
            in_specs=[pl.BlockSpec((Bt, C, St), lambda b, s: (b, 0, s))],
            out_specs=pl.BlockSpec((Bt, C_out, St), lambda b, s: (b, 0, s)),
        ),
        compiler_params=pltpu.CompilerParams(
            dimension_semantics=("parallel", "parallel"),
            vmem_limit_bytes=vmem_limit,
        ),
    )(x.reshape(B, C, HW))
    return out_flat.reshape(B, C_out, H, W)


def _reference(x, with_r=False):
    """Plain-JAX reference mirroring the PyTorch forward exactly."""
    B, C, H, W = x.shape
    yy_range = jnp.arange(H, dtype=jnp.float32) - H / 2.0
    xx_range = jnp.arange(W, dtype=jnp.float32) - W / 2.0
    yy_range = yy_range / ((H - 1) / 2.0) + 1.0 / (H - 1)
    xx_range = xx_range / ((W - 1) / 2.0) + 1.0 / (H - 1)  # (H-1): torch quirk
    grid_yy, grid_xx = jnp.meshgrid(yy_range, xx_range, indexing="ij")
    rr = jnp.sqrt(grid_yy ** 2 + grid_xx ** 2)
    grid_yy = jnp.broadcast_to(grid_yy.astype(x.dtype), (B, 1, H, W))
    grid_xx = jnp.broadcast_to(grid_xx.astype(x.dtype), (B, 1, H, W))
    out = jnp.concatenate([grid_yy, grid_xx, x], axis=1)
    if with_r:
        rr = jnp.broadcast_to(rr.astype(x.dtype), (B, 1, H, W))
        out = jnp.concatenate([rr, out], axis=1)
    return out


if __name__ == "__main__":
    key = jax.random.PRNGKey(0)

    # Primary shape (same as before): B=2, C=4, 16x16.
    B, C, H, W = 2, 4, 16, 16
    x = jax.random.normal(key, (B, C, H, W), dtype=jnp.float32)

    out = jax.block_until_ready(add_coords(x, with_r=False))
    ref = _reference(x, with_r=False)
    assert out.shape == (B, C + 2, H, W)
    assert jnp.allclose(out, ref, atol=1e-6, rtol=1e-6)

    out_r = jax.block_until_ready(add_coords(x, with_r=True))
    ref_r = _reference(x, with_r=True)
    assert out_r.shape == (B, C + 3, H, W)
    assert jnp.allclose(out_r, ref_r, atol=1e-6, rtol=1e-6)

    # bf16 path (halves HBM bytes for the channel copy).
    xb = x.astype(jnp.bfloat16)
    out_b = jax.block_until_ready(add_coords(xb, with_r=False))
    ref_b = _reference(xb, with_r=False)
    assert out_b.dtype == jnp.bfloat16
    assert jnp.allclose(out_b.astype(jnp.float32), ref_b.astype(jnp.float32),
                        atol=2e-2, rtol=2e-2)

    # Non-square image with a multi-step spatial grid and a partial last tile.
    B2, C2, H2, W2 = 2, 3, 24, 40
    x2 = jax.random.normal(jax.random.PRNGKey(1), (B2, C2, H2, W2),
                           dtype=jnp.float32)
    out2 = jax.block_until_ready(add_coords(x2, with_r=True, spatial_tile=256))
    ref2 = _reference(x2, with_r=True)
    assert out2.shape == (B2, C2 + 3, H2, W2)
    assert jnp.allclose(out2, ref2, atol=1e-6, rtol=1e-6)

    print("KERNEL_OK")
</pallas_src>

<mosaic_0001>
module attributes {stable_mosaic.version = 11 : i64} {
  func.func @_addcoords_kernel(%arg0: i32, %arg1: i32, %arg2: memref<2x4x256xf32, #tpu.memory_space<vmem>>, %arg3: memref<2x6x256xf32, #tpu.memory_space<vmem>>) attributes {dimension_semantics = [#tpu.dimension_semantics<parallel>, #tpu.dimension_semantics<parallel>], iteration_bounds = array<i64: 1, 1>, scalar_prefetch = 0 : i64, scratch_operands = 0 : i64, tpu.core_type = #tpu.core_type<tc>, window_params = [{transform_indices = @transform_0, window_bounds = array<i64: 2, 4, 256>}, {transform_indices = @transform_1, window_bounds = array<i64: 2, 6, 256>}]} {
    %c256_i32 = arith.constant 256 : i32
    %0 = arith.muli %arg1, %c256_i32 : i32
    %1 = arith.sitofp %0 : i32 to f32
    %2 = tpu.iota {dimensions = array<i32: 1>} : vector<1x256xi32>
    %3 = arith.sitofp %2 : vector<1x256xi32> to vector<1x256xf32>
    %4 = vector.broadcast %1 : f32 to vector<1x256xf32>
    %5 = arith.addf %3, %4 : vector<1x256xf32>
    %cst = arith.constant 5.000000e-01 : f32
    %6 = vector.broadcast %cst : f32 to vector<1x256xf32>
    %7 = arith.addf %5, %6 : vector<1x256xf32>
    %cst_0 = arith.constant 1.600000e+01 : f32
    %8 = vector.broadcast %cst_0 : f32 to vector<1x256xf32>
    %9 = arith.divf %7, %8 : vector<1x256xf32>
    %10 = math.floor %9 : vector<1x256xf32>
    %cst_1 = arith.constant 1.600000e+01 : f32
    %11 = vector.broadcast %cst_1 : f32 to vector<1x256xf32>
    %12 = arith.mulf %10, %11 : vector<1x256xf32>
    %13 = arith.subf %5, %12 : vector<1x256xf32>
    %cst_2 = arith.constant 8.000000e+00 : f32
    %14 = vector.broadcast %cst_2 : f32 to vector<1x256xf32>
    %15 = arith.subf %10, %14 : vector<1x256xf32>
    %cst_3 = arith.constant 7.500000e+00 : f32
    %16 = vector.broadcast %cst_3 : f32 to vector<1x256xf32>
    %17 = arith.divf %15, %16 : vector<1x256xf32>
    %cst_4 = arith.constant 0.0666666701 : f32
    %18 = vector.broadcast %cst_4 : f32 to vector<1x256xf32>
    %19 = arith.addf %17, %18 : vector<1x256xf32>
    %cst_5 = arith.constant 8.000000e+00 : f32
    %20 = vector.broadcast %cst_5 : f32 to vector<1x256xf32>
    %21 = arith.subf %13, %20 : vector<1x256xf32>
    %cst_6 = arith.constant 7.500000e+00 : f32
    %22 = vector.broadcast %cst_6 : f32 to vector<1x256xf32>
    %23 = arith.divf %21, %22 : vector<1x256xf32>
    %cst_7 = arith.constant 0.0666666701 : f32
    %24 = vector.broadcast %cst_7 : f32 to vector<1x256xf32>
    %25 = arith.addf %23, %24 : vector<1x256xf32>
    %26 = tpu.concatenate %19, %25 in 0 : vector<1x256xf32>, vector<1x256xf32> -> vector<2x256xf32>
    %27 = vector.shape_cast %26 : vector<2x256xf32> to vector<1x2x256xf32>
    %28 = vector.shape_cast %27 : vector<1x2x256xf32> to vector<1x2x256xf32>
    %29 = vector.broadcast %28 : vector<1x2x256xf32> to vector<2x2x256xf32>
    %c0 = arith.constant 0 : index
    %c0_8 = arith.constant 0 : index
    %c0_9 = arith.constant 0 : index
    %30 = vector.load %arg2[%c0, %c0_8, %c0_9] : memref<2x4x256xf32, #tpu.memory_space<vmem>>, vector<2x4x256xf32>
    %31 = tpu.concatenate %29, %30 in 1 : vector<2x2x256xf32>, vector<2x4x256xf32> -> vector<2x6x256xf32>
    %c0_10 = arith.constant 0 : index
    %c0_11 = arith.constant 0 : index
    %c0_12 = arith.constant 0 : index
    %32 = vector.load %arg3[%c0_10, %c0_11, %c0_12] : memref<2x6x256xf32, #tpu.memory_space<vmem>>, vector<2x6x256xf32>
    tpu.vector_store %arg3[%c0_10, %c0_11, %c0_12], %31 {strides = array<i32>} : memref<2x6x256xf32, #tpu.memory_space<vmem>>, vector<2x6x256xf32>,
    return
  }
  func.func @transform_0(%arg0: i32, %arg1: i32) -> (i32, i32, i32) {
    %c0_i32 = arith.constant 0 : i32
    %c0_i32_0 = arith.constant 0 : i32
    return %arg0, %c0_i32, %arg1 : i32, i32, i32
  }
  func.func @transform_1(%arg0: i32, %arg1: i32) -> (i32, i32, i32) {
    %c0_i32 = arith.constant 0 : i32
    %c0_i32_0 = arith.constant 0 : i32
    return %arg0, %c0_i32, %arg1 : i32, i32, i32
  }
}

</mosaic_0001>

<llo_original>
// kernel: tpu_custom_call.1
$region0: #{tpu_custom_call.1}
  #allocation0 [shape = 'u32[]', space=smem, size = 0x4, offset = 0x4, fixed_abs, tag = 'smem constant byte address 0x4 - core index']
  #allocation1 [shape = 'u32[144,128]{1,0:T(1,128)}', space=vmem, size = 0x12000, scoped, tag = 'internal scratch']
  %s0 = inlined_call_operand.hbm [shape: f32[2,4,256], index: 0, kind: input, shape index: {}]
  %s1 = inlined_call_operand.vmem [shape: f32[2,6,256], index: 1, kind: output, shape index: {}]
  %s2 = sld [smem:[#allocation0]]
  $region18: #{tpu_custom_call.1} parent=0
    _
  %s4 = ssub.s32 1, %s2
  %s5 = scalar_select 0, %s4, %s2
  $region1: #{tpu_custom_call.1} parent=0
    #allocation2 [shape = 'u8[8192]{0}', space=vmem, size = 0x2000, scoped, tag = 'input window, operand 0, single buffered']
    #allocation3 [shape = 's32[1]{0}', space=sflag, size = 0x4, scoped, tag = 'scoped memory for tpu_custom_call.1']
    %6 = vsyncpa [#allocation3], 0
    // Predicated region
    $region2: #{tpu_custom_call.1} parent=1 // pred_check
      _
    $region3: #{tpu_custom_call.1} parent=1 // pred_check_branch
      %8 = sbr.rel (0) target = $region5
    $region4: #{tpu_custom_call.1} parent=1 // pred_region
      %s10 = ssub.s32 256, 256
      %11 = vsyncadd [#allocation3], %s10
      %s12 = sshll.u32 [#allocation2], 4
      %s13 = int_to_ptr.vmem [resolvable:$true] %s12
      %18 = dma.hbm_to_vmem [thread:$0]  %s0, 256, %s13, [#allocation3], 128, 128, 8
    $region5: #{tpu_custom_call.1} parent=1 // pred_fallthru
      _
    // Predicated region
    $region6: #{tpu_custom_call.1} parent=1 // pred_check
      _
    $region7: #{tpu_custom_call.1} parent=1 // pred_check_branch
      %20 = sbr.rel (0) target = $region9
    $region8: #{tpu_custom_call.1} parent=1 // pred_region
      %21 = dma.done [#allocation3], 256
    $region9: #{tpu_custom_call.1} parent=1 // pred_fallthru
      _
    %s22 = smul.u32 0, 256
    %s23 = scvt.s32.f32 %s22
    %v24 = vlaneseq
    %v25 = vand.u32 %v24, 127
    %v26 = vadd.s32 %v25, 128
    %v27 = vcvt.s32.f32 %v25
    %v28 = vcvt.s32.f32 %v26
    %v29 = vstv %s23
    %v30 = vadd.f32 %v27, %v29
    %v31 = vadd.f32 %v28, %v29
    %v32 = vadd.f32 %v30, 0.5
    %v33 = vadd.f32 %v31, 0.5
    %v34 = vrcp.pop 16.0
    %v35 = vmul.f32 %v32, %v34
    %v36 = vmul.f32 %v33, %v34
    %v37 = vfloor.f32 %v35
    %v38 = vfloor.f32 %v36
    %v39 = vmul.f32 %v37, 16.0
    %v40 = vmul.f32 %v38, 16.0
    %v41 = vsub.f32 %v30, %v39
    %v42 = vsub.f32 %v31, %v40
    %v43 = vsub.f32 %v37, 8.0
    %v44 = vsub.f32 %v38, 8.0
    %v45 = vrcp.pop 7.5
    %v46 = vmul.f32 %v43, %v45
    %v47 = vmul.f32 %v44, %v45
    %v48 = vadd.f32 %v46, 0.06666667
    %v49 = vadd.f32 %v47, 0.06666667
    %v50 = vsub.f32 %v41, 8.0
    %v51 = vsub.f32 %v42, 8.0
    %v52 = vmul.f32 %v50, %v45
    %v53 = vmul.f32 %v51, %v45
    %v54 = vadd.f32 %v52, 0.06666667
    %v55 = vadd.f32 %v53, 0.06666667
    %vm56 = vcmask 1040384
    %v57 = vsel %vm56, %v48, %v54
    %v58 = vsel %vm56, %v49, %v55
    %v59 = vld [vmem:[#allocation2] sm:$0xff]
    %v60 = vld [vmem:[#allocation2 + $0x8] sm:$0xff]
    %v63 = vcombine.high %v59, %v59
    %v64 = vcombine.high %v60, %v60
    %v65 = vrot.slane %v59, 6
    %v66 = vrot.slane %v63, 6
    %v67 = vrot.slane %v60, 6
    %v68 = vrot.slane %v64, 6
    %vm73 = vcmask 1041408
    %v74 = vsel %vm73, %v57, %v65
    %v75 = vsel %vm73, %v58, %v66
    %v76 = vsel %vm73, %v57, %v67
    %v77 = vsel %vm73, %v58, %v68
    %78 = vst [vmem:[%s1] sm:$0x3f] %v74
    %79 = vst [vmem:[%s1 + $0x8] sm:$0x3f] %v75
    %80 = vst [vmem:[%s1 + $0x10] sm:$0x3f] %v76
    %81 = vst [vmem:[%s1 + $0x18] sm:$0x3f] %v77
    // Predicated region
    $region10: #{tpu_custom_call.1} parent=1 // pred_check
      _
    $region11: #{tpu_custom_call.1} parent=1 // pred_check_branch
      %83 = sbr.rel (0) target = $region13
    $region12: #{tpu_custom_call.1} parent=1 // pred_region
      _
    $region13: #{tpu_custom_call.1} parent=1 // pred_fallthru
      _
    // Predicated region
    $region14: #{tpu_custom_call.1} parent=1 // pred_check
      _
    $region15: #{tpu_custom_call.1} parent=1 // pred_check_branch
      %85 = sbr.rel (0) target = $region17
    $region16: #{tpu_custom_call.1} parent=1 // pred_region
      _
    $region17: #{tpu_custom_call.1} parent=1 // pred_fallthru
      _
    %86 = vsyncpa [#allocation3], 1

</llo_original>
